<compile_context>
chip_gen: v7x
topology: tpu7x:2x2x1
jax: 0.10.0
libtpu: 0.0.40
codegen_flags: <defaults>
</compile_context>

<pallas_src>
import functools

import jax
import jax.numpy as jnp
from jax.experimental import pallas as pl
from jax.experimental.pallas import tpu as pltpu


def _round_up(x: int, m: int) -> int:
    return ((x + m - 1) // m) * m


def _node_encoding_kernel(idx_ref, table_t_ref, out_ref, *, v_pad: int, k: int):
    # idx_ref:     (K, TM)     int32   -- rows on the lane axis
    # table_t_ref: (D, V_pad)  float32 -- transposed, zero-padded table
    # out_ref:     (D, TM)     float32 -- transposed output tile (lane-dense)
    idx = idx_ref[...]
    tm = idx.shape[-1]

    # counts_T[v, r] = #{k : idx[k, r] == v}
    iota_v = jax.lax.broadcasted_iota(jnp.int32, (v_pad, tm), 0)
    counts = jnp.zeros((v_pad, tm), jnp.float32)
    for kk in range(k):  # K is small and static -> unrolled
        counts = counts + (idx[kk:kk + 1, :] == iota_v).astype(jnp.float32)

    # table_T @ counts_T == gather-and-sum over the K axis, done on the MXU.
    out_ref[...] = jnp.dot(table_t_ref[...], counts,
                           preferred_element_type=jnp.float32)


def node_encoding(node_idx: jax.Array, table: jax.Array) -> jax.Array:
    """node_idx: [B, N, K] int, table: [V, D] f32 -> [B, N, D] f32."""
    B, N, K = node_idx.shape
    V, D = table.shape
    rows = B * N

    # Row tile: large to amortize per-step overhead; multiple of 128 so the
    # lane axis of the index/output tiles is dense.  Small problems use a
    # single grid step.
    TM = 512 if rows > 512 else _round_up(rows, 128)
    rows_pad = _round_up(rows, TM)

    # Pad the node-type axis to a multiple of 128 and pre-transpose the table
    # to [D, V_pad] (zero rows contribute nothing to the matmul).
    V_pad = _round_up(V, 128)
    table_t = jnp.pad(table.astype(jnp.float32), ((0, V_pad - V), (0, 0))).T

    # Indices as [K, rows_pad]: contiguous, lane-dense tiles.  Pad rows with 0;
    # padded rows are sliced away below, so the value is irrelevant.
    idx_t = node_idx.reshape(rows, K).astype(jnp.int32).T
    idx_t = jnp.pad(idx_t, ((0, 0), (0, rows_pad - rows)))

    grid = (rows_pad // TM,)
    kernel = functools.partial(_node_encoding_kernel, v_pad=V_pad, k=K)

    out_t = pl.pallas_call(
        kernel,
        out_shape=jax.ShapeDtypeStruct((D, rows_pad), jnp.float32),
        grid=grid,
        in_specs=[
            pl.BlockSpec((K, TM), lambda i: (0, i)),      # index tile
            # Full (transposed) table every step; it is revisited with a
            # constant block index and is tiny here, so default double
            # buffering is harmless.
            # TODO(synk): for a multi-MiB table on v7x (64 MiB VMEM), single-
            # buffer it (pipeline_mode=pl.Buffered(1)) or DMA it once manually.
            pl.BlockSpec((D, V_pad), lambda i: (0, 0)),
        ],
        out_specs=pl.BlockSpec((D, TM), lambda i: (0, i)),
        compiler_params=pltpu.CompilerParams(
            dimension_semantics=("parallel",)),  # shards row tiles across TCs on v7x
    )(idx_t, table_t)

    # Un-transpose, drop row padding, restore [B, N, D].
    return out_t[:, :rows].T.reshape(B, N, D)


if __name__ == "__main__":
    # Small shapes consistent with the module's forward:
    #   node_idx: [B, N, K] ints in [0, num_node_types)
    #   embedding table: [num_node_types, enc_dim]
    B, N, K = 2, 8, 3
    num_node_types, enc_dim = 16, 32

    key = jax.random.PRNGKey(0)
    k_tab, k_idx = jax.random.split(key)

    # nn.Embedding default init: N(0, 1)
    table = jax.random.normal(k_tab, (num_node_types, enc_dim), dtype=jnp.float32)
    node_idx = jax.random.randint(k_idx, (B, N, K), 0, num_node_types, dtype=jnp.int32)

    out = node_encoding(node_idx, table)
    out = jax.block_until_ready(out)

    # Pure-JAX reference: gather then sum over -2 axis.
    ref = jnp.take(table, node_idx, axis=0).sum(axis=-2)

    assert out.shape == (B, N, enc_dim), out.shape
    assert jnp.allclose(out, ref, atol=1e-4, rtol=1e-4), "mismatch vs reference"
    print("KERNEL_OK")
</pallas_src>

<mosaic_0001>
module attributes {stable_mosaic.version = 11 : i64} {
  func.func @_node_encoding_kernel(%arg0: i32, %arg1: memref<3x128xi32, #tpu.memory_space<vmem>>, %arg2: memref<32x128xf32, #tpu.memory_space<vmem>>, %arg3: memref<32x128xf32, #tpu.memory_space<vmem>>) attributes {dimension_semantics = [#tpu.dimension_semantics<parallel>], iteration_bounds = array<i64: 1>, scalar_prefetch = 0 : i64, scratch_operands = 0 : i64, tpu.core_type = #tpu.core_type<tc>, window_params = [{transform_indices = @transform_0, window_bounds = array<i64: 3, 128>}, {pipeline_mode = #tpu.pipeline_mode<synchronous>, transform_indices = @transform_1, window_bounds = array<i64: 32, 128>}, {transform_indices = @transform_2, window_bounds = array<i64: 32, 128>}]} {
    %c0 = arith.constant 0 : index
    %c0_0 = arith.constant 0 : index
    %0 = vector.load %arg1[%c0, %c0_0] : memref<3x128xi32, #tpu.memory_space<vmem>>, vector<3x128xi32>
    %1 = tpu.iota {dimensions = array<i32: 0>} : vector<128x128xi32>
    %cst = arith.constant 0.000000e+00 : f32
    %2 = vector.broadcast %cst : f32 to vector<128x128xf32>
    %3 = vector.extract_strided_slice %0 {offsets = [0, 0], sizes = [1, 128], strides = [1, 1]} : vector<3x128xi32> to vector<1x128xi32>
    %4 = vector.broadcast %3 : vector<1x128xi32> to vector<128x128xi32>
    %5 = arith.cmpi eq, %4, %1 : vector<128x128xi32>
    %6 = arith.extui %5 : vector<128x128xi1> to vector<128x128xi32>
    %7 = arith.sitofp %6 : vector<128x128xi32> to vector<128x128xf32>
    %8 = arith.addf %2, %7 : vector<128x128xf32>
    %9 = vector.extract_strided_slice %0 {offsets = [1, 0], sizes = [1, 128], strides = [1, 1]} : vector<3x128xi32> to vector<1x128xi32>
    %10 = vector.broadcast %9 : vector<1x128xi32> to vector<128x128xi32>
    %11 = arith.cmpi eq, %10, %1 : vector<128x128xi32>
    %12 = arith.extui %11 : vector<128x128xi1> to vector<128x128xi32>
    %13 = arith.sitofp %12 : vector<128x128xi32> to vector<128x128xf32>
    %14 = arith.addf %8, %13 : vector<128x128xf32>
    %15 = vector.extract_strided_slice %0 {offsets = [2, 0], sizes = [1, 128], strides = [1, 1]} : vector<3x128xi32> to vector<1x128xi32>
    %16 = vector.broadcast %15 : vector<1x128xi32> to vector<128x128xi32>
    %17 = arith.cmpi eq, %16, %1 : vector<128x128xi32>
    %18 = arith.extui %17 : vector<128x128xi1> to vector<128x128xi32>
    %19 = arith.sitofp %18 : vector<128x128xi32> to vector<128x128xf32>
    %20 = arith.addf %14, %19 : vector<128x128xf32>
    %c0_1 = arith.constant 0 : index
    %c0_2 = arith.constant 0 : index
    %21 = vector.load %arg2[%c0_1, %c0_2] : memref<32x128xf32, #tpu.memory_space<vmem>>, vector<32x128xf32>
    %cst_3 = arith.constant dense<0.000000e+00> : vector<32x128xf32>
    %22 = tpu.matmul %21, %20, %cst_3 {dimension_numbers = #tpu.dot_dimension_numbers<[1], [0], [0], [1], [0, 0, 1, 1], [], []>} : vector<32x128xf32>, vector<128x128xf32>, vector<32x128xf32> -> vector<32x128xf32>
    %c0_4 = arith.constant 0 : index
    %c0_5 = arith.constant 0 : index
    %23 = vector.load %arg3[%c0_4, %c0_5] : memref<32x128xf32, #tpu.memory_space<vmem>>, vector<32x128xf32>
    tpu.vector_store %arg3[%c0_4, %c0_5], %22 {strides = array<i32>} : memref<32x128xf32, #tpu.memory_space<vmem>>, vector<32x128xf32>,
    return
  }
  func.func @transform_0(%arg0: i32) -> (i32, i32) {
    %c0_i32 = arith.constant 0 : i32
    %c0_i32_0 = arith.constant 0 : i32
    return %c0_i32, %arg0 : i32, i32
  }
  func.func @transform_1(%arg0: i32) -> (i32, i32) {
    %c0_i32 = arith.constant 0 : i32
    %c0_i32_0 = arith.constant 0 : i32
    %c0_i32_1 = arith.constant 0 : i32
    return %c0_i32, %c0_i32_0 : i32, i32
  }
  func.func @transform_2(%arg0: i32) -> (i32, i32) {
    %c0_i32 = arith.constant 0 : i32
    %c0_i32_0 = arith.constant 0 : i32
    return %c0_i32, %arg0 : i32, i32
  }
}

</mosaic_0001>

<llo_original>
// kernel: tpu_custom_call.1
$region0: #{tpu_custom_call.1}
  #allocation0 [shape = 'u32[]', space=smem, size = 0x4, offset = 0x4, fixed_abs, tag = 'smem constant byte address 0x4 - core index']
  #allocation1 [shape = 'u32[144,128]{1,0:T(1,128)}', space=vmem, size = 0x12000, scoped, tag = 'internal scratch']
  %s0 = inlined_call_operand.hbm [shape: s32[3,128], index: 0, kind: input, shape index: {}]
  %s1 = inlined_call_operand.hbm [shape: f32[32,128], index: 1, kind: input, shape index: {}]
  %s2 = inlined_call_operand.hbm [shape: f32[32,128], index: 2, kind: output, shape index: {}]
  %s3 = sld [smem:[#allocation0]]
  $region26: #{tpu_custom_call.1} parent=0
    _
  %s5 = ssub.s32 1, %s3
  %s6 = scalar_select 0, %s5, %s3
  $region1: #{tpu_custom_call.1} parent=0
    #allocation2 [shape = 'u8[2048]{0}', space=vmem, size = 0x800, scoped, tag = 'input window, operand 0, single buffered']
    #allocation3 [shape = 's32[1]{0}', space=sflag, size = 0x4, scoped, tag = 'scoped memory for tpu_custom_call.1']
    #allocation4 [shape = 's32[1]{0}', space=sflag, size = 0x4, scoped, tag = 'scoped memory for tpu_custom_call.1']
    #allocation5 [shape = 'u8[16384]{0}', space=vmem, size = 0x4000, scoped, tag = 'input window, operand 1, single buffered']
    #allocation6 [shape = 's32[1]{0}', space=sflag, size = 0x4, scoped, tag = 'scoped memory for tpu_custom_call.1']
    #allocation7 [shape = 'u8[16384]{0}', space=vmem, size = 0x4000, scoped, tag = 'output window, operand 0, single buffered']
    %7 = vsyncpa [#allocation3], 0
    %8 = vsyncpa [#allocation6], 0
    %9 = vsyncpa [#allocation4], 0
    // Predicated region
    $region2: #{tpu_custom_call.1} parent=1 // pred_check
      _
    $region3: #{tpu_custom_call.1} parent=1 // pred_check_branch
      %11 = sbr.rel (0) target = $region5
    $region4: #{tpu_custom_call.1} parent=1 // pred_region
      %s13 = ssub.s32 64, 64
      %14 = vsyncadd [#allocation3], %s13
      %s16 = sshll.u32 [#allocation2], 4
      %s17 = int_to_ptr.vmem [resolvable:$true] %s16
      %19 = dma.hbm_to_vmem [thread:$0]  %s0, 64, %s17, [#allocation3]
    $region5: #{tpu_custom_call.1} parent=1 // pred_fallthru
      _
    // Predicated region
    $region6: #{tpu_custom_call.1} parent=1 // pred_check
      _
    $region7: #{tpu_custom_call.1} parent=1 // pred_check_branch
      %21 = sbr.rel (0) target = $region9
    $region8: #{tpu_custom_call.1} parent=1 // pred_region
      %s23 = ssub.s32 512, 512
      %24 = vsyncadd [#allocation6], %s23
      %s25 = sshll.u32 [#allocation5], 4
      %s26 = int_to_ptr.vmem [resolvable:$true] %s25
      %31 = dma.hbm_to_vmem [thread:$0]  %s1, 512, %s26, [#allocation6], 128, 128, 8
    $region9: #{tpu_custom_call.1} parent=1 // pred_fallthru
      _
    // Predicated region
    $region10: #{tpu_custom_call.1} parent=1 // pred_check
      _
    $region11: #{tpu_custom_call.1} parent=1 // pred_check_branch
      %33 = sbr.rel (0) target = $region13
    $region12: #{tpu_custom_call.1} parent=1 // pred_region
      %34 = dma.done [#allocation3], 64
    $region13: #{tpu_custom_call.1} parent=1 // pred_fallthru
      _
    // Predicated region
    $region14: #{tpu_custom_call.1} parent=1 // pred_check
      _
    $region15: #{tpu_custom_call.1} parent=1 // pred_check_branch
      %36 = sbr.rel (0) target = $region17
    $region16: #{tpu_custom_call.1} parent=1 // pred_region
      %37 = dma.done [#allocation6], 512
    $region17: #{tpu_custom_call.1} parent=1 // pred_fallthru
      _
    %v38 = vld [vmem:[#allocation2] sm:$0x7]
    %v39 = vlaneseq
    %v40 = vshrl.u32 %v39, 7
    %v41 = vadd.s32 %v40, 8
    %v42 = vadd.s32 %v40, 16
    %v43 = vadd.s32 %v40, 24
    %v44 = vadd.s32 %v40, 32
    %v45 = vadd.s32 %v40, 40
    %v46 = vadd.s32 %v40, 48
    %v47 = vadd.s32 %v40, 56
    %v48 = vadd.s32 %v40, 64
    %v49 = vadd.s32 %v40, 72
    %v50 = vadd.s32 %v40, 80
    %v51 = vadd.s32 %v40, 88
    %v52 = vadd.s32 %v40, 96
    %v53 = vadd.s32 %v40, 104
    %v54 = vadd.s32 %v40, 112
    %v55 = vadd.s32 %v40, 120
    %v56 = vlaneseq
    %v57 = vshrl.u32 %v56, 7
    %v58 = vsub.s32 0, %v57
    %v59 = vrot.slane %v38, %v58
    %vm60 = vcmp.eq.s32.totalorder %v59, %v40
    %vm61 = vcmp.eq.s32.totalorder %v59, %v41
    %vm62 = vcmp.eq.s32.totalorder %v59, %v42
    %vm63 = vcmp.eq.s32.totalorder %v59, %v43
    %vm64 = vcmp.eq.s32.totalorder %v59, %v44
    %vm65 = vcmp.eq.s32.totalorder %v59, %v45
    %vm66 = vcmp.eq.s32.totalorder %v59, %v46
    %vm67 = vcmp.eq.s32.totalorder %v59, %v47
    %vm68 = vcmp.eq.s32.totalorder %v59, %v48
    %vm69 = vcmp.eq.s32.totalorder %v59, %v49
    %vm70 = vcmp.eq.s32.totalorder %v59, %v50
    %vm71 = vcmp.eq.s32.totalorder %v59, %v51
    %vm72 = vcmp.eq.s32.totalorder %v59, %v52
    %vm73 = vcmp.eq.s32.totalorder %v59, %v53
    %vm74 = vcmp.eq.s32.totalorder %v59, %v54
    %vm75 = vcmp.eq.s32.totalorder %v59, %v55
    %v76 = vsel %vm60, 1, 0
    %v77 = vsel %vm61, 1, 0
    %v78 = vsel %vm62, 1, 0
    %v79 = vsel %vm63, 1, 0
    %v80 = vsel %vm64, 1, 0
    %v81 = vsel %vm65, 1, 0
    %v82 = vsel %vm66, 1, 0
    %v83 = vsel %vm67, 1, 0
    %v84 = vsel %vm68, 1, 0
    %v85 = vsel %vm69, 1, 0
    %v86 = vsel %vm70, 1, 0
    %v87 = vsel %vm71, 1, 0
    %v88 = vsel %vm72, 1, 0
    %v89 = vsel %vm73, 1, 0
    %v90 = vsel %vm74, 1, 0
    %v91 = vsel %vm75, 1, 0
    %v92 = vcvt.s32.f32 %v76
    %v93 = vcvt.s32.f32 %v77
    %v94 = vcvt.s32.f32 %v78
    %v95 = vcvt.s32.f32 %v79
    %v96 = vcvt.s32.f32 %v80
    %v97 = vcvt.s32.f32 %v81
    %v98 = vcvt.s32.f32 %v82
    %v99 = vcvt.s32.f32 %v83
    %v100 = vcvt.s32.f32 %v84
    %v101 = vcvt.s32.f32 %v85
    %v102 = vcvt.s32.f32 %v86
    %v103 = vcvt.s32.f32 %v87
    %v104 = vcvt.s32.f32 %v88
    %v105 = vcvt.s32.f32 %v89
    %v106 = vcvt.s32.f32 %v90
    %v107 = vcvt.s32.f32 %v91
    %v108 = vadd.f32 %v92, 0.0
    %v109 = vadd.f32 %v93, 0.0
    %v110 = vadd.f32 %v94, 0.0
    %v111 = vadd.f32 %v95, 0.0
    %v112 = vadd.f32 %v96, 0.0
    %v113 = vadd.f32 %v97, 0.0
    %v114 = vadd.f32 %v98, 0.0
    %v115 = vadd.f32 %v99, 0.0
    %v116 = vadd.f32 %v100, 0.0
    %v117 = vadd.f32 %v101, 0.0
    %v118 = vadd.f32 %v102, 0.0
    %v119 = vadd.f32 %v103, 0.0
    %v120 = vadd.f32 %v104, 0.0
    %v121 = vadd.f32 %v105, 0.0
    %v122 = vadd.f32 %v106, 0.0
    %v123 = vadd.f32 %v107, 0.0
    %v124 = vlaneseq
    %v125 = vshrl.u32 %v124, 7
    %v126 = vsub.s32 1, %v125
    %v127 = vrot.slane %v38, %v126
    %vm128 = vcmp.eq.s32.totalorder %v127, %v40
    %vm129 = vcmp.eq.s32.totalorder %v127, %v41
    %vm130 = vcmp.eq.s32.totalorder %v127, %v42
    %vm131 = vcmp.eq.s32.totalorder %v127, %v43
    %vm132 = vcmp.eq.s32.totalorder %v127, %v44
    %vm133 = vcmp.eq.s32.totalorder %v127, %v45
    %vm134 = vcmp.eq.s32.totalorder %v127, %v46
    %vm135 = vcmp.eq.s32.totalorder %v127, %v47
    %vm136 = vcmp.eq.s32.totalorder %v127, %v48
    %vm137 = vcmp.eq.s32.totalorder %v127, %v49
    %vm138 = vcmp.eq.s32.totalorder %v127, %v50
    %vm139 = vcmp.eq.s32.totalorder %v127, %v51
    %vm140 = vcmp.eq.s32.totalorder %v127, %v52
    %vm141 = vcmp.eq.s32.totalorder %v127, %v53
    %vm142 = vcmp.eq.s32.totalorder %v127, %v54
    %vm143 = vcmp.eq.s32.totalorder %v127, %v55
    %v144 = vsel %vm128, 1, 0
    %v145 = vsel %vm129, 1, 0
    %v146 = vsel %vm130, 1, 0
    %v147 = vsel %vm131, 1, 0
    %v148 = vsel %vm132, 1, 0
    %v149 = vsel %vm133, 1, 0
    %v150 = vsel %vm134, 1, 0
    %v151 = vsel %vm135, 1, 0
    %v152 = vsel %vm136, 1, 0
    %v153 = vsel %vm137, 1, 0
    %v154 = vsel %vm138, 1, 0
    %v155 = vsel %vm139, 1, 0
    %v156 = vsel %vm140, 1, 0
    %v157 = vsel %vm141, 1, 0
    %v158 = vsel %vm142, 1, 0
    %v159 = vsel %vm143, 1, 0
    %v160 = vcvt.s32.f32 %v144
    %v161 = vcvt.s32.f32 %v145
    %v162 = vcvt.s32.f32 %v146
    %v163 = vcvt.s32.f32 %v147
    %v164 = vcvt.s32.f32 %v148
    %v165 = vcvt.s32.f32 %v149
    %v166 = vcvt.s32.f32 %v150
    %v167 = vcvt.s32.f32 %v151
    %v168 = vcvt.s32.f32 %v152
    %v169 = vcvt.s32.f32 %v153
    %v170 = vcvt.s32.f32 %v154
    %v171 = vcvt.s32.f32 %v155
    %v172 = vcvt.s32.f32 %v156
    %v173 = vcvt.s32.f32 %v157
    %v174 = vcvt.s32.f32 %v158
    %v175 = vcvt.s32.f32 %v159
    %v176 = vadd.f32 %v108, %v160
    %v177 = vadd.f32 %v109, %v161
    %v178 = vadd.f32 %v110, %v162
    %v179 = vadd.f32 %v111, %v163
    %v180 = vadd.f32 %v112, %v164
    %v181 = vadd.f32 %v113, %v165
    %v182 = vadd.f32 %v114, %v166
    %v183 = vadd.f32 %v115, %v167
    %v184 = vadd.f32 %v116, %v168
    %v185 = vadd.f32 %v117, %v169
    %v186 = vadd.f32 %v118, %v170
    %v187 = vadd.f32 %v119, %v171
    %v188 = vadd.f32 %v120, %v172
    %v189 = vadd.f32 %v121, %v173
    %v190 = vadd.f32 %v122, %v174
    %v191 = vadd.f32 %v123, %v175
    %v192 = vlaneseq
    %v193 = vshrl.u32 %v192, 7
    %v194 = vsub.s32 2, %v193
    %v195 = vrot.slane %v38, %v194
    %vm196 = vcmp.eq.s32.totalorder %v195, %v40
    %vm197 = vcmp.eq.s32.totalorder %v195, %v41
    %vm198 = vcmp.eq.s32.totalorder %v195, %v42
    %vm199 = vcmp.eq.s32.totalorder %v195, %v43
    %vm200 = vcmp.eq.s32.totalorder %v195, %v44
    %vm201 = vcmp.eq.s32.totalorder %v195, %v45
    %vm202 = vcmp.eq.s32.totalorder %v195, %v46
    %vm203 = vcmp.eq.s32.totalorder %v195, %v47
    %vm204 = vcmp.eq.s32.totalorder %v195, %v48
    %vm205 = vcmp.eq.s32.totalorder %v195, %v49
    %vm206 = vcmp.eq.s32.totalorder %v195, %v50
    %vm207 = vcmp.eq.s32.totalorder %v195, %v51
    %vm208 = vcmp.eq.s32.totalorder %v195, %v52
    %vm209 = vcmp.eq.s32.totalorder %v195, %v53
    %vm210 = vcmp.eq.s32.totalorder %v195, %v54
    %vm211 = vcmp.eq.s32.totalorder %v195, %v55
    %v212 = vsel %vm196, 1, 0
    %v213 = vsel %vm197, 1, 0
    %v214 = vsel %vm198, 1, 0
    %v215 = vsel %vm199, 1, 0
    %v216 = vsel %vm200, 1, 0
    %v217 = vsel %vm201, 1, 0
    %v218 = vsel %vm202, 1, 0
    %v219 = vsel %vm203, 1, 0
    %v220 = vsel %vm204, 1, 0
    %v221 = vsel %vm205, 1, 0
    %v222 = vsel %vm206, 1, 0
    %v223 = vsel %vm207, 1, 0
    %v224 = vsel %vm208, 1, 0
    %v225 = vsel %vm209, 1, 0
    %v226 = vsel %vm210, 1, 0
    %v227 = vsel %vm211, 1, 0
    %v228 = vcvt.s32.f32 %v212
    %v229 = vcvt.s32.f32 %v213
    %v230 = vcvt.s32.f32 %v214
    %v231 = vcvt.s32.f32 %v215
    %v232 = vcvt.s32.f32 %v216
    %v233 = vcvt.s32.f32 %v217
    %v234 = vcvt.s32.f32 %v218
    %v235 = vcvt.s32.f32 %v219
    %v236 = vcvt.s32.f32 %v220
    %v237 = vcvt.s32.f32 %v221
    %v238 = vcvt.s32.f32 %v222
    %v239 = vcvt.s32.f32 %v223
    %v240 = vcvt.s32.f32 %v224
    %v241 = vcvt.s32.f32 %v225
    %v242 = vcvt.s32.f32 %v226
    %v243 = vcvt.s32.f32 %v227
    %v244 = vadd.f32 %v176, %v228
    %v245 = vadd.f32 %v177, %v229
    %v246 = vadd.f32 %v178, %v230
    %v247 = vadd.f32 %v179, %v231
    %v248 = vadd.f32 %v180, %v232
    %v249 = vadd.f32 %v181, %v233
    %v250 = vadd.f32 %v182, %v234
    %v251 = vadd.f32 %v183, %v235
    %v252 = vadd.f32 %v184, %v236
    %v253 = vadd.f32 %v185, %v237
    %v254 = vadd.f32 %v186, %v238
    %v255 = vadd.f32 %v187, %v239
    %v256 = vadd.f32 %v188, %v240
    %v257 = vadd.f32 %v189, %v241
    %v258 = vadd.f32 %v190, %v242
    %v259 = vadd.f32 %v191, %v243
    %v260 = vld [vmem:[#allocation5] sm:$0xff]
    %v261 = vld [vmem:[#allocation5 + $0x8] sm:$0xff]
    %v262 = vld [vmem:[#allocation5 + $0x10] sm:$0xff]
    %v263 = vld [vmem:[#allocation5 + $0x18] sm:$0xff]
    %264 = vmatprep.subr.mxu0 0.0
    %265 = vmatpush1.msra.mxu0 %v244
    %266 = vmatprep.subr.mxu0 0.0
    %267 = vmatpush1.msra.mxu0 %v245
    %268 = vmatprep.subr.mxu0 0.0
    %269 = vmatpush1.msra.mxu0 %v246
    %270 = vmatprep.subr.mxu0 0.0
    %271 = vmatpush1.msra.mxu0 %v247
    %272 = vmatprep.subr.mxu0 0.0
    %273 = vmatpush1.msra.mxu0 %v248
    %274 = vmatprep.subr.mxu0 0.0
    %275 = vmatpush1.msra.mxu0 %v249
    %276 = vmatprep.subr.mxu0 0.0
    %277 = vmatpush1.msra.mxu0 %v250
    %278 = vmatprep.subr.mxu0 0.0
    %279 = vmatpush1.msra.mxu0 %v251
    %280 = vmatprep.subr.mxu0 0.0
    %281 = vmatpush1.msra.mxu0 %v252
    %282 = vmatprep.subr.mxu0 0.0
    %283 = vmatpush1.msra.mxu0 %v253
    %284 = vmatprep.subr.mxu0 0.0
    %285 = vmatpush1.msra.mxu0 %v254
    %286 = vmatprep.subr.mxu0 0.0
    %287 = vmatpush1.msra.mxu0 %v255
    %288 = vmatprep.subr.mxu0 0.0
    %289 = vmatpush1.msra.mxu0 %v256
    %290 = vmatprep.subr.mxu0 0.0
    %291 = vmatpush1.msra.mxu0 %v257
    %292 = vmatprep.subr.mxu0 0.0
    %293 = vmatpush1.msra.mxu0 %v258
    %294 = vmatprep.subr.mxu0 0.0
    %295 = vmatpush1.msra.mxu0 %v259
    %296 = vmatprep.subr.mxu0 0.0
    %297 = vmatpush1.msra.mxu0 0.0
    %298 = vmatprep.subr.mxu0 0.0
    %299 = vmatpush1.msra.mxu0 0.0
    %300 = vmatprep.subr.mxu0 0.0
    %301 = vmatpush1.msra.mxu0 0.0
    %302 = vmatprep.subr.mxu0 0.0
    %303 = vmatpush1.msra.mxu0 0.0
    %304 = vmatprep.subr.mxu0 0.0
    %305 = vmatpush1.msra.mxu0 0.0
    %306 = vmatprep.subr.mxu0 0.0
    %307 = vmatpush1.msra.mxu0 0.0
    %308 = vmatprep.subr.mxu0 0.0
    %309 = vmatpush1.msra.mxu0 0.0
    %310 = vmatprep.subr.mxu0 0.0
    %311 = vmatpush1.msra.mxu0 0.0
    %312 = vmatprep.subr.mxu0 0.0
    %313 = vmatpush1.msra.mxu0 0.0
    %314 = vmatprep.subr.mxu0 0.0
    %315 = vmatpush1.msra.mxu0 0.0
    %316 = vmatprep.subr.mxu0 0.0
    %317 = vmatpush1.msra.mxu0 0.0
    %318 = vmatprep.subr.mxu0 0.0
    %319 = vmatpush1.msra.mxu0 0.0
    %320 = vmatprep.subr.mxu0 0.0
    %321 = vmatpush1.msra.mxu0 0.0
    %322 = vmatprep.subr.mxu0 0.0
    %323 = vmatpush1.msra.mxu0 0.0
    %324 = vmatprep.subr.mxu0 0.0
    %325 = vmatpush1.msra.mxu0 0.0
    %326 = vmatprep.subr.mxu0 0.0
    %327 = vmatpush1.msra.mxu0 0.0
    %328 = vmatprep.mubr.f32.mxu0 0.0
    %329 = vmatmul.mubr.f32.gmra.mrb[0].mxu0 %v260
    %v330 = vpop.f32.mrb[0].mxu0
    %v331 = vadd.f32 0.0, %v330
    %v332 = vpop.f32.mrb[0].mxu0
    %333 = vmatprep.mubr.f32.mxu0 0.0
    %334 = vmatmul.mubr.f32.gmra.mrb[0].mxu0 %v261
    %v335 = vpop.f32.mrb[0].mxu0
    %v336 = vadd.f32 0.0, %v335
    %v337 = vpop.f32.mrb[0].mxu0
    %338 = vmatprep.mubr.f32.mxu0 0.0
    %339 = vmatmul.mubr.f32.gmra.mrb[0].mxu0 %v262
    %v340 = vpop.f32.mrb[0].mxu0
    %v341 = vadd.f32 0.0, %v340
    %v342 = vpop.f32.mrb[0].mxu0
    %343 = vmatprep.mubr.f32.mxu0 0.0
    %344 = vmatmul.mubr.f32.gmra.mrb[0].mxu0 %v263
    %v345 = vpop.f32.mrb[0].mxu0
    %v346 = vadd.f32 0.0, %v345
    %v347 = vpop.f32.mrb[0].mxu0
    %348 = vdwg.mxu0
    %349 = vst [vmem:[#allocation7] sm:$0xff] %v331
    %350 = vst [vmem:[#allocation7 + $0x8] sm:$0xff] %v336
    %351 = vst [vmem:[#allocation7 + $0x10] sm:$0xff] %v341
    %352 = vst [vmem:[#allocation7 + $0x18] sm:$0xff] %v346
    // Predicated region
    $region18: #{tpu_custom_call.1} parent=1 // pred_check
      _
    $region19: #{tpu_custom_call.1} parent=1 // pred_check_branch
      %354 = sbr.rel (0) target = $region21
    $region20: #{tpu_custom_call.1} parent=1 // pred_region
      %s356 = ssub.s32 512, 512
      %357 = vsyncadd [#allocation4], %s356
      %s358 = sshll.u32 [#allocation7], 4
      %s359 = int_to_ptr.vmem [resolvable:$true] %s358
      %364 = dma.vmem_to_hbm [thread:$0]  %s359, 512, %s2, [#allocation4], 128, 128, 8
    $region21: #{tpu_custom_call.1} parent=1 // pred_fallthru
      _
    // Predicated region
    $region22: #{tpu_custom_call.1} parent=1 // pred_check
      _
    $region23: #{tpu_custom_call.1} parent=1 // pred_check_branch
      %366 = sbr.rel (0) target = $region25
    $region24: #{tpu_custom_call.1} parent=1 // pred_region
      %367 = dma.done [#allocation4], 512
    $region25: #{tpu_custom_call.1} parent=1 // pred_fallthru
      _
    %368 = vsyncpa [#allocation3], 1
    %369 = vsyncpa [#allocation6], 1
    %370 = vsyncpa [#allocation4], 1

</llo_original>
